<compile_context>
chip_gen: v7x
topology: tpu7x:2x2x1
jax: 0.10.0
libtpu: 0.0.40
codegen_flags: <defaults>
</compile_context>

<pallas_src>
import jax
import jax.numpy as jnp
from jax import lax
from jax.experimental import pallas as pl
from jax.experimental.pallas import tpu as pltpu


def _final_score_kernel(x_ref, w1t_ref, b1_ref, w2_ref, b2_ref, out_ref):
    # x_ref:   (TM, P)  row tile of node embeddings (batch folded into rows)
    # w1t_ref: (P, P)   fnode.weight, pre-transposed (y = x @ w1t + b1)
    # b1_ref:  (1, P)   fnode.bias
    # w2_ref:  (1, P)   fscore.weight
    # b2_ref:  (1,)     fscore.bias, in SMEM
    # out_ref: (1, TM)  scores, node axis on lanes (lane-dense store)
    h = jnp.dot(x_ref[...], w1t_ref[...], preferred_element_type=jnp.float32)
    h = jnp.maximum(h + b1_ref[...], 0.0)                       # ReLU(fnode(x))
    # (1,P) . (TM,P) contracted on P -> (1, TM): no cross-lane relayout needed.
    s = lax.dot_general(w2_ref[...], h, (((1,), (1,)), ((), ())),
                        preferred_element_type=jnp.float32)
    out_ref[...] = (s + b2_ref[0]).astype(out_ref.dtype)


def _round_up(x, m):
    return ((x + m - 1) // m) * m


def final_scores_all_nodes(x, w1, b1, w2, b2, *, max_tm=512):
    """x: [B, N, P] -> scores for every node: [B, N] (float32)."""
    B, N, P = x.shape
    R = B * N
    # Lane-dense row tile: multiple of 128, capped so the x double-buffer plus
    # resident weights stays tiny even under v7x's reduced VMEM budget.
    TM = min(max_tm, _round_up(R, 128))
    R_pad = _round_up(R, TM)
    num_tiles = R_pad // TM

    xf = x.reshape(R, P).astype(jnp.float32)
    if R_pad != R:
        xf = jnp.pad(xf, ((0, R_pad - R), (0, 0)))

    out = pl.pallas_call(
        _final_score_kernel,
        out_shape=jax.ShapeDtypeStruct((1, R_pad), jnp.float32),
        grid_spec=pltpu.PrefetchScalarGridSpec(
            num_scalar_prefetch=0,
            grid=(num_tiles,),
            in_specs=[
                pl.BlockSpec((TM, P), lambda i: (i, 0)),        # x row tiles
                pl.BlockSpec((P, P), lambda i: (0, 0)),         # w1.T (resident)
                pl.BlockSpec((1, P), lambda i: (0, 0)),         # b1
                pl.BlockSpec((1, P), lambda i: (0, 0)),         # w2
                pl.BlockSpec(memory_space=pltpu.MemorySpace.SMEM),  # b2 scalar
            ],
            out_specs=pl.BlockSpec((1, TM), lambda i: (0, i)),
        ),
        compiler_params=pltpu.CompilerParams(
            dimension_semantics=("parallel",)),                 # row tiles split across TCs on v7x
    )(
        xf,
        jnp.asarray(w1, jnp.float32).T,            # pre-transpose once in XLA
        jnp.asarray(b1, jnp.float32).reshape(1, P),
        jnp.asarray(w2, jnp.float32).reshape(1, P),
        jnp.asarray(b2, jnp.float32).reshape(1),
    )
    return out[0, :R].reshape(B, N)


def compute_final_score(mu, masks, w1, b1, w2, b2):
    """Mirror of ComputeFinalScore.forward.

    mu:    list of arrays; mu[l] has shape [B, n_l, p]; only mu[1:-1] are used.
    masks: list (len B) of int/bool arrays of length sum(n_l for l in 1..L-2).
    Returns a list of 1-D score arrays (one per batch, ragged length).
    """
    x = jnp.concatenate(list(mu[1:-1]), axis=1)               # [B, N, p]
    scores_all = final_scores_all_nodes(x, w1, b1, w2, b2)    # [B, N]
    # TODO(synk): the ragged nonzero() gather has a data-dependent output shape
    # per batch, so it has no static-shape Pallas/jit equivalent; it stays as
    # thin host-side glue (identical math to masking before the Linear layers).
    out = []
    for b in range(len(masks)):
        idx = jnp.nonzero(jnp.asarray(masks[b]))[0]
        out.append(scores_all[b][idx])
    return out


if __name__ == "__main__":
    key = jax.random.PRNGKey(0)
    p = 32          # embedding dim at the final stage
    B = 2           # batch size
    n_nodes = [8, 8, 8, 8]   # nodes per mu layer (layers 1..2 are used)
    N = sum(n_nodes[1:-1])   # 16 nodes in the concatenated middle layers

    keys = jax.random.split(key, 8)

    # Deterministic parameter init (shapes follow nn.Linear(p, p) / nn.Linear(p, 1)).
    bound1 = 1.0 / jnp.sqrt(p)
    w1 = jax.random.uniform(keys[0], (p, p), jnp.float32, -bound1, bound1)   # fnode.weight
    b1 = jax.random.uniform(keys[1], (p,),   jnp.float32, -bound1, bound1)   # fnode.bias
    w2 = jax.random.uniform(keys[2], (1, p), jnp.float32, -bound1, bound1)   # fscore.weight
    b2 = jax.random.uniform(keys[3], (1,),   jnp.float32, -bound1, bound1)   # fscore.bias

    # mu: list of per-layer embeddings [B, n_l, p]
    mu = [
        jax.random.normal(keys[4 + l], (B, n_nodes[l], p), jnp.float32)
        for l in range(len(n_nodes))
    ]

    # masks: per-batch node masks over the concatenated middle layers (length N)
    masks = [
        (jax.random.uniform(jax.random.PRNGKey(100 + b), (N,)) > 0.4).astype(jnp.int32)
        for b in range(B)
    ]

    scores = compute_final_score(mu, masks, w1, b1, w2, b2)
    for s in scores:
        jax.block_until_ready(s)

    # Pure-JAX reference check (same math as the PyTorch module).
    x = jnp.concatenate(list(mu[1:-1]), axis=1)                       # [B, N, p]
    h_ref = jnp.maximum(jnp.einsum('bnp,qp->bnq', x, w1) + b1, 0.0)
    ref_all = jnp.einsum('bnq,oq->bno', h_ref, w2)[..., 0] + b2[0]    # [B, N]
    for b in range(B):
        idx = jnp.nonzero(masks[b])[0]
        ref = ref_all[b][idx]
        assert scores[b].shape == ref.shape
        assert jnp.allclose(scores[b], ref, atol=1e-5, rtol=1e-5)
        assert scores[b].shape[0] == int(jnp.sum(masks[b]))

    print("KERNEL_OK")
</pallas_src>

<mosaic_0001>
module attributes {stable_mosaic.version = 11 : i64} {
  func.func @_final_score_kernel(%arg0: i32, %arg1: memref<128x32xf32, #tpu.memory_space<vmem>>, %arg2: memref<32x32xf32, #tpu.memory_space<vmem>>, %arg3: memref<1x32xf32, #tpu.memory_space<vmem>>, %arg4: memref<1x32xf32, #tpu.memory_space<vmem>>, %arg5: memref<1xf32, #tpu.memory_space<smem>>, %arg6: memref<1x128xf32, #tpu.memory_space<vmem>>) attributes {dimension_semantics = [#tpu.dimension_semantics<parallel>], iteration_bounds = array<i64: 1>, scalar_prefetch = 0 : i64, scratch_operands = 0 : i64, tpu.core_type = #tpu.core_type<tc>, window_params = [{transform_indices = @transform_0, window_bounds = array<i64: 128, 32>}, {pipeline_mode = #tpu.pipeline_mode<synchronous>, transform_indices = @transform_1, window_bounds = array<i64: 32, 32>}, {pipeline_mode = #tpu.pipeline_mode<synchronous>, transform_indices = @transform_2, window_bounds = array<i64: 1, 32>}, {pipeline_mode = #tpu.pipeline_mode<synchronous>, transform_indices = @transform_3, window_bounds = array<i64: 1, 32>}, {transform_indices = @transform_4, window_bounds = array<i64: 1>}, {transform_indices = @transform_5, window_bounds = array<i64: 1, 128>}]} {
    %c0 = arith.constant 0 : index
    %c0_0 = arith.constant 0 : index
    %0 = vector.load %arg1[%c0, %c0_0] : memref<128x32xf32, #tpu.memory_space<vmem>>, vector<128x32xf32>
    %c0_1 = arith.constant 0 : index
    %c0_2 = arith.constant 0 : index
    %1 = vector.load %arg2[%c0_1, %c0_2] : memref<32x32xf32, #tpu.memory_space<vmem>>, vector<32x32xf32>
    %cst = arith.constant dense<0.000000e+00> : vector<128x32xf32>
    %2 = tpu.matmul %0, %1, %cst {dimension_numbers = #tpu.dot_dimension_numbers<[1], [0], [0], [1], [0, 0, 1, 1], [], []>} : vector<128x32xf32>, vector<32x32xf32>, vector<128x32xf32> -> vector<128x32xf32>
    %c0_3 = arith.constant 0 : index
    %c0_4 = arith.constant 0 : index
    %3 = vector.load %arg3[%c0_3, %c0_4] : memref<1x32xf32, #tpu.memory_space<vmem>>, vector<1x32xf32>
    %4 = vector.broadcast %3 : vector<1x32xf32> to vector<128x32xf32>
    %5 = arith.addf %2, %4 : vector<128x32xf32>
    %cst_5 = arith.constant 0.000000e+00 : f32
    %6 = vector.broadcast %cst_5 : f32 to vector<128x32xf32>
    %7 = arith.maximumf %5, %6 : vector<128x32xf32>
    %c0_6 = arith.constant 0 : index
    %c0_7 = arith.constant 0 : index
    %8 = vector.load %arg4[%c0_6, %c0_7] : memref<1x32xf32, #tpu.memory_space<vmem>>, vector<1x32xf32>
    %cst_8 = arith.constant dense<0.000000e+00> : vector<1x128xf32>
    %9 = tpu.matmul %8, %7, %cst_8 {dimension_numbers = #tpu.dot_dimension_numbers<[1], [1], [0], [0], [0, 0, 1, 0], [], []>} : vector<1x32xf32>, vector<128x32xf32>, vector<1x128xf32> -> vector<1x128xf32>
    %c0_9 = arith.constant 0 : index
    %10 = memref.load %arg5[%c0_9] : memref<1xf32, #tpu.memory_space<smem>>
    %11 = vector.broadcast %10 : f32 to vector<1x128xf32>
    %12 = arith.addf %9, %11 : vector<1x128xf32>
    %c0_10 = arith.constant 0 : index
    %c0_11 = arith.constant 0 : index
    %13 = vector.load %arg6[%c0_10, %c0_11] : memref<1x128xf32, #tpu.memory_space<vmem>>, vector<1x128xf32>
    tpu.vector_store %arg6[%c0_10, %c0_11], %12 {strides = array<i32>} : memref<1x128xf32, #tpu.memory_space<vmem>>, vector<1x128xf32>,
    return
  }
  func.func @transform_0(%arg0: i32) -> (i32, i32) {
    %c0_i32 = arith.constant 0 : i32
    %c0_i32_0 = arith.constant 0 : i32
    return %arg0, %c0_i32 : i32, i32
  }
  func.func @transform_1(%arg0: i32) -> (i32, i32) {
    %c0_i32 = arith.constant 0 : i32
    %c0_i32_0 = arith.constant 0 : i32
    %c0_i32_1 = arith.constant 0 : i32
    return %c0_i32, %c0_i32_0 : i32, i32
  }
  func.func @transform_2(%arg0: i32) -> (i32, i32) {
    %c0_i32 = arith.constant 0 : i32
    %c0_i32_0 = arith.constant 0 : i32
    %c0_i32_1 = arith.constant 0 : i32
    return %c0_i32, %c0_i32_0 : i32, i32
  }
  func.func @transform_3(%arg0: i32) -> (i32, i32) {
    %c0_i32 = arith.constant 0 : i32
    %c0_i32_0 = arith.constant 0 : i32
    %c0_i32_1 = arith.constant 0 : i32
    return %c0_i32, %c0_i32_0 : i32, i32
  }
  func.func @transform_4(%arg0: i32) -> i32 {
    %c0_i32 = arith.constant 0 : i32
    %c0_i32_0 = arith.constant 0 : i32
    return %c0_i32 : i32
  }
  func.func @transform_5(%arg0: i32) -> (i32, i32) {
    %c0_i32 = arith.constant 0 : i32
    %c0_i32_0 = arith.constant 0 : i32
    return %c0_i32, %arg0 : i32, i32
  }
}

</mosaic_0001>

<llo_original>
// kernel: tpu_custom_call.1
$region0: #{tpu_custom_call.1}
  #allocation0 [shape = 'u32[]', space=smem, size = 0x4, offset = 0x4, fixed_abs, tag = 'smem constant byte address 0x4 - core index']
  #allocation1 [shape = 'u32[144,128]{1,0:T(1,128)}', space=vmem, size = 0x12000, scoped, tag = 'internal scratch']
  #allocation2 [shape = 'f32[1]{0:T(128)S(6)}', space=smem, size = 0x200, scoped, tag = 'scoped memory for tpu_custom_call.1']
  %s0 = inlined_call_operand.vmem [shape: f32[128,32], index: 0, kind: input, shape index: {}]
  %s1 = inlined_call_operand.vmem [shape: f32[32,32], index: 1, kind: input, shape index: {}]
  %s2 = inlined_call_operand.vmem [shape: f32[1,32], index: 2, kind: input, shape index: {}]
  %s3 = inlined_call_operand.vmem [shape: f32[1,32], index: 3, kind: input, shape index: {}]
  %s4 = inlined_call_operand.<no memory space> [shape: f32[1], index: 4, kind: input, shape index: {}]
  %s5 = inlined_call_operand.hbm [shape: f32[1,128], index: 5, kind: output, shape index: {}]
  %s6 = sld [smem:[#allocation0]]
  $region30: #{tpu_custom_call.1} parent=0
    _
  %s8 = ssub.s32 1, %s6
  %s9 = scalar_select 0, %s8, %s6
  %10 = sst [smem:[#allocation2]] %s4
  $region1: #{tpu_custom_call.1} parent=0
    #allocation3 [shape = 'u8[512]{0}', space=vmem, size = 0x400, scoped, tag = 'output window, operand 0, single buffered']
    #allocation4 [shape = 's32[1]{0}', space=sflag, size = 0x4, scoped, tag = 'scoped memory for tpu_custom_call.1']
    %11 = vsyncpa [#allocation4], 0
    // Predicated region
    $region2: #{tpu_custom_call.1} parent=1 // pred_check
      _
    $region3: #{tpu_custom_call.1} parent=1 // pred_check_branch
      %13 = sbr.rel (0) target = $region5
    $region4: #{tpu_custom_call.1} parent=1 // pred_region
      _
    $region5: #{tpu_custom_call.1} parent=1 // pred_fallthru
      _
    // Predicated region
    $region6: #{tpu_custom_call.1} parent=1 // pred_check
      _
    $region7: #{tpu_custom_call.1} parent=1 // pred_check_branch
      %15 = sbr.rel (0) target = $region9
    $region8: #{tpu_custom_call.1} parent=1 // pred_region
      _
    $region9: #{tpu_custom_call.1} parent=1 // pred_fallthru
      _
    // Predicated region
    $region10: #{tpu_custom_call.1} parent=1 // pred_check
      _
    $region11: #{tpu_custom_call.1} parent=1 // pred_check_branch
      %17 = sbr.rel (0) target = $region13
    $region12: #{tpu_custom_call.1} parent=1 // pred_region
      _
    $region13: #{tpu_custom_call.1} parent=1 // pred_fallthru
      _
    // Predicated region
    $region14: #{tpu_custom_call.1} parent=1 // pred_check
      _
    $region15: #{tpu_custom_call.1} parent=1 // pred_check_branch
      %19 = sbr.rel (0) target = $region17
    $region16: #{tpu_custom_call.1} parent=1 // pred_region
      _
    $region17: #{tpu_custom_call.1} parent=1 // pred_fallthru
      _
    // Predicated region
    $region18: #{tpu_custom_call.1} parent=1 // pred_check
      _
    $region19: #{tpu_custom_call.1} parent=1 // pred_check_branch
      %21 = sbr.rel (0) target = $region21
    $region20: #{tpu_custom_call.1} parent=1 // pred_region
      _
    $region21: #{tpu_custom_call.1} parent=1 // pred_fallthru
      _
    %v22 = vld [vmem:[%s0] sm:$0xff]
    %v23 = vld [vmem:[%s0 + $0x8] sm:$0xff]
    %v24 = vld [vmem:[%s0 + $0x10] sm:$0xff]
    %v25 = vld [vmem:[%s0 + $0x18] sm:$0xff]
    %v26 = vld [vmem:[%s0 + $0x20] sm:$0xff]
    %v27 = vld [vmem:[%s0 + $0x28] sm:$0xff]
    %v28 = vld [vmem:[%s0 + $0x30] sm:$0xff]
    %v29 = vld [vmem:[%s0 + $0x38] sm:$0xff]
    %v30 = vld [vmem:[%s0 + $0x40] sm:$0xff]
    %v31 = vld [vmem:[%s0 + $0x48] sm:$0xff]
    %v32 = vld [vmem:[%s0 + $0x50] sm:$0xff]
    %v33 = vld [vmem:[%s0 + $0x58] sm:$0xff]
    %v34 = vld [vmem:[%s0 + $0x60] sm:$0xff]
    %v35 = vld [vmem:[%s0 + $0x68] sm:$0xff]
    %v36 = vld [vmem:[%s0 + $0x70] sm:$0xff]
    %v37 = vld [vmem:[%s0 + $0x78] sm:$0xff]
    %v38 = vld [vmem:[%s1] sm:$0xff]
    %v39 = vld [vmem:[%s1 + $0x8] sm:$0xff]
    %v40 = vld [vmem:[%s1 + $0x10] sm:$0xff]
    %v41 = vld [vmem:[%s1 + $0x18] sm:$0xff]
    %v42 = vld [vmem:[%s2] sm:$0x1]
    %v44 = vlaneseq
    %v45 = vshrl.u32 %v44, 7
    %v46 = vsub.s32 0, %v45
    %v47 = vrot.slane %v42, %v46
    %vm49 = vcmask 261120
    %v51 = vsel %vm49, %v22, 0
    %v54 = vsel %vm49, %v23, 0
    %v57 = vsel %vm49, %v24, 0
    %v60 = vsel %vm49, %v25, 0
    %v63 = vsel %vm49, %v26, 0
    %v66 = vsel %vm49, %v27, 0
    %v69 = vsel %vm49, %v28, 0
    %v72 = vsel %vm49, %v29, 0
    %v75 = vsel %vm49, %v30, 0
    %v78 = vsel %vm49, %v31, 0
    %v81 = vsel %vm49, %v32, 0
    %v84 = vsel %vm49, %v33, 0
    %v87 = vsel %vm49, %v34, 0
    %v90 = vsel %vm49, %v35, 0
    %v93 = vsel %vm49, %v36, 0
    %v96 = vsel %vm49, %v37, 0
    %98 = vmatprep.subr.mxu0 0.0
    %99 = vmatpush1.msra.mxu0 %v38
    %100 = vmatprep.subr.mxu0 0.0
    %101 = vmatpush1.msra.mxu0 %v39
    %102 = vmatprep.subr.mxu0 0.0
    %103 = vmatpush1.msra.mxu0 %v40
    %104 = vmatprep.subr.mxu0 0.0
    %105 = vmatpush1.msra.mxu0 %v41
    %106 = vmatprep.subr.mxu0 0.0
    %107 = vmatpush1.msra.mxu0 0.0
    %108 = vmatprep.subr.mxu0 0.0
    %109 = vmatpush1.msra.mxu0 0.0
    %110 = vmatprep.subr.mxu0 0.0
    %111 = vmatpush1.msra.mxu0 0.0
    %112 = vmatprep.subr.mxu0 0.0
    %113 = vmatpush1.msra.mxu0 0.0
    %114 = vmatprep.subr.mxu0 0.0
    %115 = vmatpush1.msra.mxu0 0.0
    %116 = vmatprep.subr.mxu0 0.0
    %117 = vmatpush1.msra.mxu0 0.0
    %118 = vmatprep.subr.mxu0 0.0
    %119 = vmatpush1.msra.mxu0 0.0
    %120 = vmatprep.subr.mxu0 0.0
    %121 = vmatpush1.msra.mxu0 0.0
    %122 = vmatprep.subr.mxu0 0.0
    %123 = vmatpush1.msra.mxu0 0.0
    %124 = vmatprep.subr.mxu0 0.0
    %125 = vmatpush1.msra.mxu0 0.0
    %126 = vmatprep.subr.mxu0 0.0
    %127 = vmatpush1.msra.mxu0 0.0
    %128 = vmatprep.subr.mxu0 0.0
    %129 = vmatpush1.msra.mxu0 0.0
    %130 = vmatprep.subr.mxu0 0.0
    %131 = vmatpush1.msra.mxu0 0.0
    %132 = vmatprep.subr.mxu0 0.0
    %133 = vmatpush1.msra.mxu0 0.0
    %134 = vmatprep.subr.mxu0 0.0
    %135 = vmatpush1.msra.mxu0 0.0
    %136 = vmatprep.subr.mxu0 0.0
    %137 = vmatpush1.msra.mxu0 0.0
    %138 = vmatprep.subr.mxu0 0.0
    %139 = vmatpush1.msra.mxu0 0.0
    %140 = vmatprep.subr.mxu0 0.0
    %141 = vmatpush1.msra.mxu0 0.0
    %142 = vmatprep.subr.mxu0 0.0
    %143 = vmatpush1.msra.mxu0 0.0
    %144 = vmatprep.subr.mxu0 0.0
    %145 = vmatpush1.msra.mxu0 0.0
    %146 = vmatprep.subr.mxu0 0.0
    %147 = vmatpush1.msra.mxu0 0.0
    %148 = vmatprep.subr.mxu0 0.0
    %149 = vmatpush1.msra.mxu0 0.0
    %150 = vmatprep.subr.mxu0 0.0
    %151 = vmatpush1.msra.mxu0 0.0
    %152 = vmatprep.subr.mxu0 0.0
    %153 = vmatpush1.msra.mxu0 0.0
    %154 = vmatprep.subr.mxu0 0.0
    %155 = vmatpush1.msra.mxu0 0.0
    %156 = vmatprep.subr.mxu0 0.0
    %157 = vmatpush1.msra.mxu0 0.0
    %158 = vmatprep.subr.mxu0 0.0
    %159 = vmatpush1.msra.mxu0 0.0
    %160 = vmatprep.subr.mxu0 0.0
    %161 = vmatpush1.msra.mxu0 0.0
    %162 = vmatprep.mubr.f32.mxu0 0.0
    %163 = vmatmul.mubr.f32.gmra.mrb[0].mxu0 %v51
    %v164 = vpop.f32.mrb[0].mxu0
    %v165 = vadd.f32 %v47, %v164
    %v166 = vpop.f32.mrb[0].mxu0
    %167 = vmatprep.mubr.f32.mxu0 0.0
    %168 = vmatmul.mubr.f32.gmra.mrb[0].mxu0 %v54
    %v169 = vpop.f32.mrb[0].mxu0
    %v170 = vadd.f32 %v47, %v169
    %v171 = vpop.f32.mrb[0].mxu0
    %172 = vmatprep.mubr.f32.mxu0 0.0
    %173 = vmatmul.mubr.f32.gmra.mrb[0].mxu0 %v57
    %v174 = vpop.f32.mrb[0].mxu0
    %v175 = vadd.f32 %v47, %v174
    %v176 = vpop.f32.mrb[0].mxu0
    %177 = vmatprep.mubr.f32.mxu0 0.0
    %178 = vmatmul.mubr.f32.gmra.mrb[0].mxu0 %v60
    %v179 = vpop.f32.mrb[0].mxu0
    %v180 = vadd.f32 %v47, %v179
    %v181 = vpop.f32.mrb[0].mxu0
    %182 = vmatprep.mubr.f32.mxu0 0.0
    %183 = vmatmul.mubr.f32.gmra.mrb[0].mxu0 %v63
    %v184 = vpop.f32.mrb[0].mxu0
    %v185 = vadd.f32 %v47, %v184
    %v186 = vpop.f32.mrb[0].mxu0
    %187 = vmatprep.mubr.f32.mxu0 0.0
    %188 = vmatmul.mubr.f32.gmra.mrb[0].mxu0 %v66
    %v189 = vpop.f32.mrb[0].mxu0
    %v190 = vadd.f32 %v47, %v189
    %v191 = vpop.f32.mrb[0].mxu0
    %192 = vmatprep.mubr.f32.mxu0 0.0
    %193 = vmatmul.mubr.f32.gmra.mrb[0].mxu0 %v69
    %v194 = vpop.f32.mrb[0].mxu0
    %v195 = vadd.f32 %v47, %v194
    %v196 = vpop.f32.mrb[0].mxu0
    %197 = vmatprep.mubr.f32.mxu0 0.0
    %198 = vmatmul.mubr.f32.gmra.mrb[0].mxu0 %v72
    %v199 = vpop.f32.mrb[0].mxu0
    %v200 = vadd.f32 %v47, %v199
    %v201 = vpop.f32.mrb[0].mxu0
    %202 = vmatprep.mubr.f32.mxu0 0.0
    %203 = vmatmul.mubr.f32.gmra.mrb[0].mxu0 %v75
    %v204 = vpop.f32.mrb[0].mxu0
    %v205 = vadd.f32 %v47, %v204
    %v206 = vpop.f32.mrb[0].mxu0
    %207 = vmatprep.mubr.f32.mxu0 0.0
    %208 = vmatmul.mubr.f32.gmra.mrb[0].mxu0 %v78
    %v209 = vpop.f32.mrb[0].mxu0
    %v210 = vadd.f32 %v47, %v209
    %v211 = vpop.f32.mrb[0].mxu0
    %212 = vmatprep.mubr.f32.mxu0 0.0
    %213 = vmatmul.mubr.f32.gmra.mrb[0].mxu0 %v81
    %v214 = vpop.f32.mrb[0].mxu0
    %v215 = vadd.f32 %v47, %v214
    %v216 = vpop.f32.mrb[0].mxu0
    %217 = vmatprep.mubr.f32.mxu0 0.0
    %218 = vmatmul.mubr.f32.gmra.mrb[0].mxu0 %v84
    %v219 = vpop.f32.mrb[0].mxu0
    %v220 = vadd.f32 %v47, %v219
    %v221 = vpop.f32.mrb[0].mxu0
    %222 = vmatprep.mubr.f32.mxu0 0.0
    %223 = vmatmul.mubr.f32.gmra.mrb[0].mxu0 %v87
    %v224 = vpop.f32.mrb[0].mxu0
    %v225 = vadd.f32 %v47, %v224
    %v226 = vpop.f32.mrb[0].mxu0
    %227 = vmatprep.mubr.f32.mxu0 0.0
    %228 = vmatmul.mubr.f32.gmra.mrb[0].mxu0 %v90
    %v229 = vpop.f32.mrb[0].mxu0
    %v230 = vadd.f32 %v47, %v229
    %v231 = vpop.f32.mrb[0].mxu0
    %232 = vmatprep.mubr.f32.mxu0 0.0
    %233 = vmatmul.mubr.f32.gmra.mrb[0].mxu0 %v93
    %v234 = vpop.f32.mrb[0].mxu0
    %v235 = vadd.f32 %v47, %v234
    %v236 = vpop.f32.mrb[0].mxu0
    %237 = vmatprep.mubr.f32.mxu0 0.0
    %238 = vmatmul.mubr.f32.gmra.mrb[0].mxu0 %v96
    %v239 = vpop.f32.mrb[0].mxu0
    %v240 = vadd.f32 %v47, %v239
    %v241 = vpop.f32.mrb[0].mxu0
    %242 = vdwg.mxu0
    %v243 = vmax.f32 %v165, 0.0
    %v244 = vmax.f32 %v170, 0.0
    %v245 = vmax.f32 %v175, 0.0
    %v246 = vmax.f32 %v180, 0.0
    %v247 = vmax.f32 %v185, 0.0
    %v248 = vmax.f32 %v190, 0.0
    %v249 = vmax.f32 %v195, 0.0
    %v250 = vmax.f32 %v200, 0.0
    %v251 = vmax.f32 %v205, 0.0
    %v252 = vmax.f32 %v210, 0.0
    %v253 = vmax.f32 %v215, 0.0
    %v254 = vmax.f32 %v220, 0.0
    %v255 = vmax.f32 %v225, 0.0
    %v256 = vmax.f32 %v230, 0.0
    %v257 = vmax.f32 %v235, 0.0
    %v258 = vmax.f32 %v240, 0.0
    %v259 = vld [vmem:[%s3] sm:$0x1]
    %s260 = sld [smem:[#allocation2]]
    %v261 = vstv %s260
    %v263 = vsel %vm49, %v259, 0
    %v266 = vsel %vm49, %v243, 0
    %v269 = vsel %vm49, %v244, 0
    %v272 = vsel %vm49, %v245, 0
    %v275 = vsel %vm49, %v246, 0
    %v278 = vsel %vm49, %v247, 0
    %v281 = vsel %vm49, %v248, 0
    %v284 = vsel %vm49, %v249, 0
    %v287 = vsel %vm49, %v250, 0
    %v290 = vsel %vm49, %v251, 0
    %v293 = vsel %vm49, %v252, 0
    %v296 = vsel %vm49, %v253, 0
    %v299 = vsel %vm49, %v254, 0
    %v302 = vsel %vm49, %v255, 0
    %v305 = vsel %vm49, %v256, 0
    %v308 = vsel %vm49, %v257, 0
    %v311 = vsel %vm49, %v258, 0
    %313 = vmatprep.subr.mxu0 0.0
    %314 = vmatpush1.xpose.msra.mxu0 %v266
    %315 = vmatprep.subr.mxu0 0.0
    %316 = vmatpush1.xpose.msra.mxu0 %v269
    %317 = vmatprep.subr.mxu0 0.0
    %318 = vmatpush1.xpose.msra.mxu0 %v272
    %319 = vmatprep.subr.mxu0 0.0
    %320 = vmatpush1.xpose.msra.mxu0 %v275
    %321 = vmatprep.subr.mxu0 0.0
    %322 = vmatpush1.xpose.msra.mxu0 %v278
    %323 = vmatprep.subr.mxu0 0.0
    %324 = vmatpush1.xpose.msra.mxu0 %v281
    %325 = vmatprep.subr.mxu0 0.0
    %326 = vmatpush1.xpose.msra.mxu0 %v284
    %327 = vmatprep.subr.mxu0 0.0
    %328 = vmatpush1.xpose.msra.mxu0 %v287
    %329 = vmatprep.subr.mxu0 0.0
    %330 = vmatpush1.xpose.msra.mxu0 %v290
    %331 = vmatprep.subr.mxu0 0.0
    %332 = vmatpush1.xpose.msra.mxu0 %v293
    %333 = vmatprep.subr.mxu0 0.0
    %334 = vmatpush1.xpose.msra.mxu0 %v296
    %335 = vmatprep.subr.mxu0 0.0
    %336 = vmatpush1.xpose.msra.mxu0 %v299
    %337 = vmatprep.subr.mxu0 0.0
    %338 = vmatpush1.xpose.msra.mxu0 %v302
    %339 = vmatprep.subr.mxu0 0.0
    %340 = vmatpush1.xpose.msra.mxu0 %v305
    %341 = vmatprep.subr.mxu0 0.0
    %342 = vmatpush1.xpose.msra.mxu0 %v308
    %343 = vmatprep.subr.mxu0 0.0
    %344 = vmatpush1.xpose.msra.mxu0 %v311
    %345 = vmatprep.subr.mxu0 0.0
    %346 = vmatpush1.xpose.msra.mxu0 0.0
    %347 = vmatprep.subr.mxu0 0.0
    %348 = vmatpush1.xpose.msra.mxu0 0.0
    %349 = vmatprep.subr.mxu0 0.0
    %350 = vmatpush1.xpose.msra.mxu0 0.0
    %351 = vmatprep.subr.mxu0 0.0
    %352 = vmatpush1.xpose.msra.mxu0 0.0
    %353 = vmatprep.subr.mxu0 0.0
    %354 = vmatpush1.xpose.msra.mxu0 0.0
    %355 = vmatprep.subr.mxu0 0.0
    %356 = vmatpush1.xpose.msra.mxu0 0.0
    %357 = vmatprep.subr.mxu0 0.0
    %358 = vmatpush1.xpose.msra.mxu0 0.0
    %359 = vmatprep.subr.mxu0 0.0
    %360 = vmatpush1.xpose.msra.mxu0 0.0
    %361 = vmatprep.subr.mxu0 0.0
    %362 = vmatpush1.xpose.msra.mxu0 0.0
    %363 = vmatprep.subr.mxu0 0.0
    %364 = vmatpush1.xpose.msra.mxu0 0.0
    %365 = vmatprep.subr.mxu0 0.0
    %366 = vmatpush1.xpose.msra.mxu0 0.0
    %367 = vmatprep.subr.mxu0 0.0
    %368 = vmatpush1.xpose.msra.mxu0 0.0
    %369 = vmatprep.subr.mxu0 0.0
    %370 = vmatpush1.xpose.msra.mxu0 0.0
    %371 = vmatprep.subr.mxu0 0.0
    %372 = vmatpush1.xpose.msra.mxu0 0.0
    %373 = vmatprep.subr.mxu0 0.0
    %374 = vmatpush1.xpose.msra.mxu0 0.0
    %375 = vmatprep.subr.mxu0 0.0
    %376 = vmatpush1.xpose.msra.mxu0 0.0
    %377 = vmatprep.mubr.f32.mxu0 0.0
    %378 = vmatmul.mubr.f32.gmra.mrb[0].mxu0 %v263
    %v379 = vpop.f32.mrb[0].mxu0
    %v380 = vadd.f32 %v261, %v379
    %v381 = vpop.f32.mrb[0].mxu0
    %382 = vdwg.mxu0
    %383 = vst [vmem:[#allocation3] sm:$0x1] %v380
    // Predicated region
    $region22: #{tpu_custom_call.1} parent=1 // pred_check
      _
    $region23: #{tpu_custom_call.1} parent=1 // pred_check_branch
      %385 = sbr.rel (0) target = $region25
    $region24: #{tpu_custom_call.1} parent=1 // pred_region
      %s387 = ssub.s32 16, 16
      %388 = vsyncadd [#allocation4], %s387
      %s390 = sshll.u32 [#allocation3], 4
      %s391 = int_to_ptr.vmem [resolvable:$true] %s390
      %393 = dma.vmem_to_hbm [thread:$0]  %s391, 16, %s5, [#allocation4]
    $region25: #{tpu_custom_call.1} parent=1 // pred_fallthru
      _
    // Predicated region
    $region26: #{tpu_custom_call.1} parent=1 // pred_check
      _
    $region27: #{tpu_custom_call.1} parent=1 // pred_check_branch
      %395 = sbr.rel (0) target = $region29
    $region28: #{tpu_custom_call.1} parent=1 // pred_region
      %396 = dma.done [#allocation4], 16
    $region29: #{tpu_custom_call.1} parent=1 // pred_fallthru
      _
    %397 = vsyncpa [#allocation4], 1

</llo_original>
